<compile_context>
chip_gen: v6e
topology: v6e:2x2x1
jax: 0.10.0
libtpu: 0.0.40
codegen_flags: <defaults>
</compile_context>

<pallas_src>
import functools

import jax
import jax.numpy as jnp
from jax.experimental import pallas as pl
from jax.experimental.pallas import tpu as pltpu


# ---------------------------------------------------------------------------
# Generation-aware budgets
# ---------------------------------------------------------------------------
def _physical_vmem_bytes():
    try:
        info = pltpu.get_tpu_info()
        return int(getattr(info, "vmem_capacity_bytes", 64 << 20))
    except Exception:
        return 64 << 20  # conservative (v7x-sized)


def _vmem_budgets():
    phys = _physical_vmem_bytes()
    if phys >= (96 << 20):          # v5e / v6e: 128 MiB physical VMEM
        slab = 8 << 20              # per-(rows, lanes) input slab
        vmem_limit = 64 << 20
    else:                           # v7x: 64 MiB physical VMEM
        slab = 4 << 20
        vmem_limit = 28 << 20
    return slab, vmem_limit


def _largest_divisor(n, k, cap):
    """Largest d <= cap with d % k == 0 and n % d == 0 (0 if none)."""
    best = 0
    d = k
    limit = min(n, cap)
    while d <= limit:
        if n % d == 0:
            best = d
        d += k
    return best


def _plan_tiles(R, HW, itemsize, slab_bytes, row_cap=1024):
    """Pick (tile_r, tile_m) for the 2-D (N*C, H*W) view."""
    # f32 intermediates dominate in-kernel, so plan as if 4-byte elements.
    itemsize = max(itemsize, 4)
    # Lane (last) dim: prefer the largest lane-dense (multiple-of-128) block.
    if HW % 128 == 0:
        lane_cap = max(128, slab_bytes // (8 * itemsize))
        tile_m = _largest_divisor(HW, 128, lane_cap) or 128
    else:
        # Full spatial extent as one block (legal: equals the full array dim).
        # TODO(synk): add a padded/masked lane path for gigantic non-128 HW.
        tile_m = HW
    # Row (second-to-last) dim.
    row_budget = max(8, min(row_cap, slab_bytes // max(tile_m * itemsize, 1)))
    if R <= row_budget:
        tile_r = R
    elif R % 8 == 0:
        tile_r = _largest_divisor(R, 8, row_budget) or 8
    else:
        # TODO(synk): pad the row axis when N*C is huge and not a multiple of 8.
        tile_r = R
    return tile_r, tile_m


# ---------------------------------------------------------------------------
# Streaming pass 1: per-row [sum, sum-of-squares] partials.
#   x_ref:   (tile_r, tile_m) block in the input dtype
#   out_ref: (tile_r, 2) f32 block, resident across the m ("arbitrary") axis
# ---------------------------------------------------------------------------
def _stats_kernel(x_ref, out_ref):
    @pl.when(pl.program_id(1) == 0)
    def _():
        out_ref[...] = jnp.zeros_like(out_ref)

    x = x_ref[...].astype(jnp.float32)                       # (tile_r, tile_m)
    out_ref[:, 0:1] += jnp.sum(x, axis=1, keepdims=True)
    out_ref[:, 1:2] += jnp.sum(x * x, axis=1, keepdims=True)


def _batch_stats(x2, tile_r, tile_m, vmem_limit):
    R, HW = x2.shape
    grid = (R // tile_r, HW // tile_m)
    return pl.pallas_call(
        _stats_kernel,
        out_shape=jax.ShapeDtypeStruct((R, 2), jnp.float32),
        grid=grid,
        in_specs=[pl.BlockSpec((tile_r, tile_m), lambda r, m: (r, m))],
        out_specs=pl.BlockSpec((tile_r, 2), lambda r, m: (r, 0)),
        compiler_params=pltpu.CompilerParams(
            dimension_semantics=("parallel", "arbitrary"),
            vmem_limit_bytes=vmem_limit),
    )(x2)                                                    # (N*C, 2)


# ---------------------------------------------------------------------------
# Streaming pass 2: elementwise y = x * scale[row] + shift[row]
#   ss_ref packs (scale, shift) per row into one (tile_r, 2) block.
# ---------------------------------------------------------------------------
def _normalize_kernel(x_ref, ss_ref, y_ref):
    x = x_ref[...].astype(jnp.float32)                       # (tile_r, tile_m)
    scale = ss_ref[:, 0:1]                                   # (tile_r, 1)
    shift = ss_ref[:, 1:2]
    # TODO(synk): bf16 compute path on v6e/v7x (bf16 VPU) to halve vreg traffic.
    y_ref[...] = (x * scale + shift).astype(y_ref.dtype)


def _normalize(x2, ss, tile_r, tile_m, vmem_limit):
    R, HW = x2.shape
    grid = (R // tile_r, HW // tile_m)
    # TODO(synk): sweep pipeline_mode=pl.Buffered(3) on v7x once tiles are large.
    return pl.pallas_call(
        _normalize_kernel,
        out_shape=jax.ShapeDtypeStruct((R, HW), x2.dtype),
        grid=grid,
        in_specs=[
            pl.BlockSpec((tile_r, tile_m), lambda r, m: (r, m)),
            pl.BlockSpec((tile_r, 2), lambda r, m: (r, 0)),
        ],
        out_specs=pl.BlockSpec((tile_r, tile_m), lambda r, m: (r, m)),
        compiler_params=pltpu.CompilerParams(
            dimension_semantics=("parallel", "parallel"),
            vmem_limit_bytes=vmem_limit),
    )(x2, ss)


# ---------------------------------------------------------------------------
# Fused single-pass kernel (x fully resident in VMEM): one HBM read of x,
# one HBM write of y.  Variance is computed centered (better numerics).
#   x_ref: (N, C, HW)   wb_ref: (C, 2) packed [weight, bias]
#   y_ref: (N, C, HW)   stats_ref: (C, 2) packed [batch mean, biased var]
# ---------------------------------------------------------------------------
def _fused_kernel(x_ref, wb_ref, y_ref, stats_ref, *, eps):
    x = x_ref[...].astype(jnp.float32)                       # (N, C, HW)
    n, _, hw = x.shape
    inv_m = 1.0 / float(n * hw)
    s = jnp.sum(jnp.sum(x, axis=2, keepdims=True), axis=0, keepdims=True)
    mean = s * inv_m                                         # (1, C, 1)
    xc = x - mean
    var = jnp.sum(jnp.sum(xc * xc, axis=2, keepdims=True),
                  axis=0, keepdims=True) * inv_m             # (1, C, 1), biased
    inv = jax.lax.rsqrt(var + eps)                           # eps: static float
    wb = wb_ref[...]                                         # (C, 2)
    w = wb[None, :, 0:1]
    b = wb[None, :, 1:2]
    y_ref[...] = (xc * (inv * w) + b).astype(y_ref.dtype)
    stats_ref[:, 0:1] = mean[0]
    stats_ref[:, 1:2] = var[0]


def _fused_bn(x3, wb, eps, vmem_limit):
    N, C, HW = x3.shape
    return pl.pallas_call(
        functools.partial(_fused_kernel, eps=eps),
        out_shape=(jax.ShapeDtypeStruct((N, C, HW), x3.dtype),
                   jax.ShapeDtypeStruct((C, 2), jnp.float32)),
        compiler_params=pltpu.CompilerParams(vmem_limit_bytes=vmem_limit),
    )(x3, wb)


# ---------------------------------------------------------------------------
# Public forward
# ---------------------------------------------------------------------------
def batch_norm2d(x, weight, bias, running_mean, running_var,
                 *, eps=1e-5, momentum=0.1, training=True,
                 force_streaming=False):
    """BatchNorm2d forward (NCHW). Returns (y, new_running_mean, new_running_var)."""
    N, C, H, W = x.shape
    HW = H * W
    R = N * C
    M = N * HW
    itemsize = jnp.dtype(x.dtype).itemsize

    slab, vmem_limit = _vmem_budgets()

    w_f32 = weight.astype(jnp.float32)
    b_f32 = bias.astype(jnp.float32)

    x_bytes = R * HW * itemsize
    # Budget: in + out blocks (input dtype) plus ~4 full-size f32 temporaries.
    fused_ok = (training and not force_streaming
                and (2 * x_bytes + 4 * R * HW * 4) <= (vmem_limit - (4 << 20)))

    if fused_ok:
        x3 = x.reshape(N, C, HW)                             # free reshape
        wb = jnp.stack([w_f32, b_f32], axis=-1)              # (C, 2)
        y3, stats = _fused_bn(x3, wb, float(eps), vmem_limit)
        mean = stats[:, 0]
        var = stats[:, 1]                                    # biased
        y = y3.reshape(N, C, H, W)
    else:
        x2 = x.reshape(R, HW)                                # free reshape
        tile_r, tile_m = _plan_tiles(R, HW, itemsize, slab)
        if training:
            per_row = _batch_stats(x2, tile_r, tile_m, vmem_limit)   # (N*C, 2)
            per_ch = per_row.reshape(N, C, 2).sum(axis=0)            # (C, 2)
            mean = per_ch[:, 0] / M
            # TODO(synk): E[x^2]-E[x]^2 loses precision when |mean| >> std; a
            # Welford / shifted-moment variant would be more robust for huge M.
            var = jnp.maximum(per_ch[:, 1] / M - mean * mean, 0.0)
        else:
            mean = running_mean.astype(jnp.float32)
            var = running_var.astype(jnp.float32)

        inv = jax.lax.rsqrt(var + eps)
        scale = w_f32 * inv                                  # (C,)
        shift = b_f32 - mean * scale
        ss = jnp.broadcast_to(jnp.stack([scale, shift], axis=-1)[None],
                              (N, C, 2)).reshape(R, 2)       # tiny
        y2 = _normalize(x2, ss, tile_r, tile_m, vmem_limit)
        y = y2.reshape(N, C, H, W)

    if training:
        unbiased = var * (M / max(M - 1, 1))
        new_rm = (1.0 - momentum) * running_mean.astype(jnp.float32) + momentum * mean
        new_rv = (1.0 - momentum) * running_var.astype(jnp.float32) + momentum * unbiased
    else:
        new_rm, new_rv = running_mean, running_var
    return y, new_rm, new_rv


if __name__ == "__main__":
    key = jax.random.PRNGKey(0)
    N, C, H, W = 2, 4, 16, 16
    x = jax.random.normal(key, (N, C, H, W), dtype=jnp.float32)

    # nn.BatchNorm2d default parameter init.
    weight = jnp.ones((C,), jnp.float32)
    bias = jnp.zeros((C,), jnp.float32)
    running_mean = jnp.zeros((C,), jnp.float32)
    running_var = jnp.ones((C,), jnp.float32)

    # Reference: F.batch_norm in training mode + running-stat update.
    mean_ref = jnp.mean(x, axis=(0, 2, 3))
    var_ref = jnp.var(x, axis=(0, 2, 3))
    y_ref = ((x - mean_ref[None, :, None, None])
             * jax.lax.rsqrt(var_ref[None, :, None, None] + 1e-5)
             * weight[None, :, None, None] + bias[None, :, None, None])
    M = N * H * W
    rm_ref = 0.9 * running_mean + 0.1 * mean_ref
    rv_ref = 0.9 * running_var + 0.1 * var_ref * (M / (M - 1))

    # Path 1: fused single-pass kernel (small activations).
    y, rm, rv = batch_norm2d(x, weight, bias, running_mean, running_var,
                             eps=1e-5, momentum=0.1, training=True)
    jax.block_until_ready((y, rm, rv))
    assert jnp.allclose(y, y_ref, atol=1e-4, rtol=1e-4)
    assert jnp.allclose(rm, rm_ref, atol=1e-5, rtol=1e-5)
    assert jnp.allclose(rv, rv_ref, atol=1e-4, rtol=1e-4)

    # Path 2: streaming two-pass kernels (what large activations use).
    y_s, rm_s, rv_s = batch_norm2d(x, weight, bias, running_mean, running_var,
                                   eps=1e-5, momentum=0.1, training=True,
                                   force_streaming=True)
    jax.block_until_ready((y_s, rm_s, rv_s))
    assert jnp.allclose(y_s, y_ref, atol=1e-4, rtol=1e-4)
    assert jnp.allclose(rm_s, rm_ref, atol=1e-5, rtol=1e-5)
    assert jnp.allclose(rv_s, rv_ref, atol=1e-4, rtol=1e-4)

    # Path 3: eval mode (normalize with running stats, no update).
    y_ev, _, _ = batch_norm2d(x, weight, bias, rm, rv, training=False)
    jax.block_until_ready(y_ev)
    y_ev_ref = ((x - rm[None, :, None, None])
                * jax.lax.rsqrt(rv[None, :, None, None] + 1e-5)
                * weight[None, :, None, None] + bias[None, :, None, None])
    assert jnp.allclose(y_ev, y_ev_ref, atol=1e-4, rtol=1e-4)

    print("KERNEL_OK")
</pallas_src>

<mosaic_0001>
module attributes {stable_mosaic.version = 11 : i64} {
  func.func @_fused_kernel(%arg0: memref<2x4x256xf32, #tpu.memory_space<vmem>>, %arg1: memref<4x2xf32, #tpu.memory_space<vmem>>, %arg2: memref<2x4x256xf32, #tpu.memory_space<vmem>>, %arg3: memref<4x2xf32, #tpu.memory_space<vmem>>) attributes {dimension_semantics = [], scalar_prefetch = 0 : i64, scratch_operands = 0 : i64, tpu.core_type = #tpu.core_type<tc>} {
    %c0 = arith.constant 0 : index
    %c0_0 = arith.constant 0 : index
    %c0_1 = arith.constant 0 : index
    %0 = vector.load %arg0[%c0, %c0_0, %c0_1] : memref<2x4x256xf32, #tpu.memory_space<vmem>>, vector<2x4x256xf32>
    %cst = arith.constant dense<0.000000e+00> : vector<2x4xf32>
    %1 = vector.multi_reduction <add>, %0, %cst [2] : vector<2x4x256xf32> to vector<2x4xf32>
    %2 = vector.shape_cast %1 : vector<2x4xf32> to vector<2x4x1xf32>
    %cst_2 = arith.constant dense<0.000000e+00> : vector<4x1xf32>
    %3 = vector.multi_reduction <add>, %2, %cst_2 [0] : vector<2x4x1xf32> to vector<4x1xf32>
    %4 = vector.shape_cast %3 : vector<4x1xf32> to vector<1x4x1xf32>
    %cst_3 = arith.constant 0.001953125 : f32
    %5 = vector.broadcast %cst_3 : f32 to vector<1x4x1xf32>
    %6 = arith.mulf %4, %5 : vector<1x4x1xf32>
    %7 = vector.broadcast %6 : vector<1x4x1xf32> to vector<2x4x256xf32>
    %8 = arith.subf %0, %7 : vector<2x4x256xf32>
    %9 = arith.mulf %8, %8 : vector<2x4x256xf32>
    %cst_4 = arith.constant dense<0.000000e+00> : vector<2x4xf32>
    %10 = vector.multi_reduction <add>, %9, %cst_4 [2] : vector<2x4x256xf32> to vector<2x4xf32>
    %11 = vector.shape_cast %10 : vector<2x4xf32> to vector<2x4x1xf32>
    %cst_5 = arith.constant dense<0.000000e+00> : vector<4x1xf32>
    %12 = vector.multi_reduction <add>, %11, %cst_5 [0] : vector<2x4x1xf32> to vector<4x1xf32>
    %13 = vector.shape_cast %12 : vector<4x1xf32> to vector<1x4x1xf32>
    %cst_6 = arith.constant 0.001953125 : f32
    %14 = vector.broadcast %cst_6 : f32 to vector<1x4x1xf32>
    %15 = arith.mulf %13, %14 : vector<1x4x1xf32>
    %cst_7 = arith.constant 9.99999974E-6 : f32
    %16 = vector.broadcast %cst_7 : f32 to vector<1x4x1xf32>
    %17 = arith.addf %15, %16 : vector<1x4x1xf32>
    %18 = math.rsqrt %17 : vector<1x4x1xf32>
    %c0_8 = arith.constant 0 : index
    %c0_9 = arith.constant 0 : index
    %19 = vector.load %arg1[%c0_8, %c0_9] : memref<4x2xf32, #tpu.memory_space<vmem>>, vector<4x2xf32>
    %20 = vector.extract_strided_slice %19 {offsets = [0, 0], sizes = [4, 1], strides = [1, 1]} : vector<4x2xf32> to vector<4x1xf32>
    %21 = vector.shape_cast %20 : vector<4x1xf32> to vector<1x4x1xf32>
    %22 = vector.extract_strided_slice %19 {offsets = [0, 1], sizes = [4, 1], strides = [1, 1]} : vector<4x2xf32> to vector<4x1xf32>
    %23 = vector.shape_cast %22 : vector<4x1xf32> to vector<1x4x1xf32>
    %24 = arith.mulf %18, %21 : vector<1x4x1xf32>
    %25 = vector.broadcast %24 : vector<1x4x1xf32> to vector<2x4x256xf32>
    %26 = arith.mulf %8, %25 : vector<2x4x256xf32>
    %27 = vector.broadcast %23 : vector<1x4x1xf32> to vector<2x4x256xf32>
    %28 = arith.addf %26, %27 : vector<2x4x256xf32>
    %c0_10 = arith.constant 0 : index
    %c0_11 = arith.constant 0 : index
    %c0_12 = arith.constant 0 : index
    %29 = vector.load %arg2[%c0_10, %c0_11, %c0_12] : memref<2x4x256xf32, #tpu.memory_space<vmem>>, vector<2x4x256xf32>
    tpu.vector_store %arg2[%c0_10, %c0_11, %c0_12], %28 {strides = array<i32>} : memref<2x4x256xf32, #tpu.memory_space<vmem>>, vector<2x4x256xf32>,
    %30 = vector.shape_cast %6 : vector<1x4x1xf32> to vector<4x1xf32>
    %c0_13 = arith.constant 0 : index
    %c0_14 = arith.constant 0 : index
    %31 = vector.load %arg3[%c0_13, %c0_14] : memref<4x2xf32, #tpu.memory_space<vmem>>, vector<4x1xf32>
    tpu.vector_store %arg3[%c0_13, %c0_14], %30 {strides = array<i32>} : memref<4x2xf32, #tpu.memory_space<vmem>>, vector<4x1xf32>,
    %32 = vector.shape_cast %15 : vector<1x4x1xf32> to vector<4x1xf32>
    %c0_15 = arith.constant 0 : index
    %c1 = arith.constant 1 : index
    %33 = vector.load %arg3[%c0_15, %c1] : memref<4x2xf32, #tpu.memory_space<vmem>>, vector<4x1xf32>
    tpu.vector_store %arg3[%c0_15, %c1], %32 {strides = array<i32>} : memref<4x2xf32, #tpu.memory_space<vmem>>, vector<4x1xf32>,
    return
  }
}

</mosaic_0001>

<llo_original>
// kernel: tpu_custom_call.1
$region0: #{tpu_custom_call.1}
  #allocation0 [shape = 'u32[]', space=smem, size = 0x4, offset = 0x4, fixed_abs, tag = 'smem constant byte address 0x4 - core index']
  #allocation1 [shape = 'u32[144,128]{1,0:T(1,128)}', space=vmem, size = 0x12000, scoped, tag = 'internal scratch']
  %s0 = inlined_call_operand.hbm [shape: f32[2,4,256], index: 0, kind: input, shape index: {}]
  %s1 = inlined_call_operand.vmem [shape: f32[4,2], index: 1, kind: input, shape index: {}]
  %s2 = inlined_call_operand.hbm [shape: f32[2,4,256], index: 2, kind: output, shape index: {0}]
  %s3 = inlined_call_operand.vmem [shape: f32[4,2], index: 3, kind: output, shape index: {1}]
  %4 = xla_tuple %s2, %s3
  %s5 = sld [smem:[#allocation0]]
  $region30: #{tpu_custom_call.1} parent=0
    _
  %s7 = ssub.s32 1, %s5
  %s8 = scalar_select 0, %s7, %s5
  $region1: #{tpu_custom_call.1} parent=0
    #allocation2 [shape = 'u8[8192]{0}', space=vmem, size = 0x2000, scoped, tag = 'input window, operand 0, single buffered']
    #allocation3 [shape = 's32[1]{0}', space=sflag, size = 0x4, scoped, tag = 'scoped memory for tpu_custom_call.1']
    #allocation4 [shape = 's32[1]{0}', space=sflag, size = 0x4, scoped, tag = 'scoped memory for tpu_custom_call.1']
    #allocation5 [shape = 'u8[8192]{0}', space=vmem, size = 0x2000, scoped, tag = 'output window, operand 0, single buffered']
    %9 = vsyncpa [#allocation3], 0
    %10 = vsyncpa [#allocation4], 0
    // Predicated region
    $region2: #{tpu_custom_call.1} parent=1 // pred_check
      _
    $region3: #{tpu_custom_call.1} parent=1 // pred_check_branch
      %12 = sbr.rel (0) target = $region5
    $region4: #{tpu_custom_call.1} parent=1 // pred_region
      %s14 = ssub.s32 256, 256
      %15 = vsyncadd [#allocation3], %s14
      %s16 = sshll.u32 [#allocation2], 4
      %s17 = int_to_ptr.vmem [resolvable:$true] %s16
      %22 = dma.hbm_to_vmem [thread:$0]  %s0, 256, %s17, [#allocation3], 128, 128, 8
    $region5: #{tpu_custom_call.1} parent=1 // pred_fallthru
      _
    // Predicated region
    $region6: #{tpu_custom_call.1} parent=1 // pred_check
      _
    $region7: #{tpu_custom_call.1} parent=1 // pred_check_branch
      %24 = sbr.rel (0) target = $region9
    $region8: #{tpu_custom_call.1} parent=1 // pred_region
      _
    $region9: #{tpu_custom_call.1} parent=1 // pred_fallthru
      _
    // Predicated region
    $region10: #{tpu_custom_call.1} parent=1 // pred_check
      _
    $region11: #{tpu_custom_call.1} parent=1 // pred_check_branch
      %26 = sbr.rel (0) target = $region13
    $region12: #{tpu_custom_call.1} parent=1 // pred_region
      %27 = dma.done [#allocation3], 256
    $region13: #{tpu_custom_call.1} parent=1 // pred_fallthru
      _
    %v28 = vld [vmem:[#allocation2] sm:$0xff]
    %v29 = vld [vmem:[#allocation2 + $0x8] sm:$0xff]
    %v32 = vcombine.high %v28, %v28
    %v33 = vcombine.high %v29, %v29
    %vm36 = vcmask 1043456
    %v37 = vsel %vm36, %v28, 0.0
    %v38 = vsel %vm36, %v32, 0.0
    %v39 = vadd.f32 %v37, %v38
    %40 = vadd.xlane.f32.xlu0 %v39
    %v41 = vpop.xlane.xlu0 %40
    %v42 = vsel %vm36, %v29, 0.0
    %v43 = vsel %vm36, %v33, 0.0
    %v44 = vadd.f32 %v42, %v43
    %45 = vadd.xlane.f32.xlu0 %v44
    %v46 = vpop.xlane.xlu0 %45
    %v47 = vsel %vm36, %v41, 0.0
    %v48 = vsel %vm36, %v46, 0.0
    %v49 = vadd.f32 %v47, %v48
    %v50 = vmul.f32 %v49, 0.001953125
    %v53 = vunpack.c.l.s4 839922192
    %v54 = vunpack.c.0.s8 %v53
    %v55 = vlaneseq
    %v56 = vshrl.u32 %v55, 7
    %v57 = vsub.s32 %v54, %v56
    %v58 = vrot.slane %v50, %v57
    %v60 = vsub.f32 %v28, %v58
    %v61 = vsub.f32 %v29, %v58
    %v62 = vmul.f32 %v60, %v60
    %v63 = vmul.f32 %v61, %v61
    %v66 = vcombine.high %v62, %v62
    %v67 = vcombine.high %v63, %v63
    %v70 = vsel %vm36, %v62, 0.0
    %v71 = vsel %vm36, %v66, 0.0
    %v72 = vadd.f32 %v70, %v71
    %73 = vadd.xlane.f32.xlu0 %v72
    %v74 = vpop.xlane.xlu0 %73
    %v75 = vsel %vm36, %v63, 0.0
    %v76 = vsel %vm36, %v67, 0.0
    %v77 = vadd.f32 %v75, %v76
    %78 = vadd.xlane.f32.xlu0 %v77
    %v79 = vpop.xlane.xlu0 %78
    %v80 = vsel %vm36, %v74, 0.0
    %v81 = vsel %vm36, %v79, 0.0
    %v82 = vadd.f32 %v80, %v81
    %v83 = vmul.f32 %v82, 0.001953125
    %v84 = vadd.f32 %v83, 1e-05
    %v85 = vrsqrt.pop %v84
    %v86 = vld [vmem:[%s1] sm:$0xf]
    %v87 = vmul.f32 %v85, %v86
    %89 = vset.pattern.permute.xlu0 0
    %90 = vperm.xlu0 %89, %v87
    %v91 = vpop.permute.xlu0 %90
    %v93 = vunpack.c.l.s4 839922192
    %v94 = vunpack.c.0.s8 %v93
    %v95 = vlaneseq
    %v96 = vshrl.u32 %v95, 7
    %v97 = vsub.s32 %v94, %v96
    %v98 = vrot.slane %v91, %v97
    %v100 = vmul.f32 %v60, %v98
    %v101 = vmul.f32 %v61, %v98
    %103 = vset.pattern.permute.xlu0 1
    %104 = vperm.xlu0 %103, %v86
    %v105 = vpop.permute.xlu0 %104
    %v107 = vunpack.c.l.s4 839922192
    %v108 = vunpack.c.0.s8 %v107
    %v109 = vlaneseq
    %v110 = vshrl.u32 %v109, 7
    %v111 = vsub.s32 %v108, %v110
    %v112 = vrot.slane %v105, %v111
    %v114 = vadd.f32 %v100, %v112
    %v115 = vadd.f32 %v101, %v112
    %116 = vst [vmem:[#allocation5] sm:$0xff] %v114
    %117 = vst [vmem:[#allocation5 + $0x8] sm:$0xff] %v115
    %vm118 = vcmask 3072
    %119 = vst.msk [vmem:[%s3] sm:$0xf] %vm118, %v50
    %vm120 = vcmask 11272
    %121 = vst.msk [vmem:[%s3] sm:$0xf] %vm120, %v83
    // Predicated region
    $region14: #{tpu_custom_call.1} parent=1 // pred_check
      _
    $region15: #{tpu_custom_call.1} parent=1 // pred_check_branch
      %123 = sbr.rel (0) target = $region17
    $region16: #{tpu_custom_call.1} parent=1 // pred_region
      %s125 = ssub.s32 256, 256
      %126 = vsyncadd [#allocation4], %s125
      %s127 = sshll.u32 [#allocation5], 4
      %s128 = int_to_ptr.vmem [resolvable:$true] %s127
      %133 = dma.vmem_to_hbm [thread:$0]  %s128, 256, %s2, [#allocation4], 128, 128, 8
    $region17: #{tpu_custom_call.1} parent=1 // pred_fallthru
      _
    // Predicated region
    $region18: #{tpu_custom_call.1} parent=1 // pred_check
      _
    $region19: #{tpu_custom_call.1} parent=1 // pred_check_branch
      %135 = sbr.rel (0) target = $region21
    $region20: #{tpu_custom_call.1} parent=1 // pred_region
      _
    $region21: #{tpu_custom_call.1} parent=1 // pred_fallthru
      _
    // Predicated region
    $region22: #{tpu_custom_call.1} parent=1 // pred_check
      _
    $region23: #{tpu_custom_call.1} parent=1 // pred_check_branch
      %137 = sbr.rel (0) target = $region25
    $region24: #{tpu_custom_call.1} parent=1 // pred_region
      %138 = dma.done [#allocation4], 256
    $region25: #{tpu_custom_call.1} parent=1 // pred_fallthru
      _
    // Predicated region
    $region26: #{tpu_custom_call.1} parent=1 // pred_check
      _
    $region27: #{tpu_custom_call.1} parent=1 // pred_check_branch
      %140 = sbr.rel (0) target = $region29
    $region28: #{tpu_custom_call.1} parent=1 // pred_region
      _
    $region29: #{tpu_custom_call.1} parent=1 // pred_fallthru
      _
    %141 = vsyncpa [#allocation3], 1
    %142 = vsyncpa [#allocation4], 1

</llo_original>
